<compile_context>
chip_gen: v5e
topology: v5e:2x2
jax: 0.10.0
libtpu: 0.0.40
codegen_flags: <defaults>
</compile_context>

<pallas_src>
import functools

import jax
import jax.numpy as jnp
from jax.experimental import pallas as pl
from jax.experimental.pallas import tpu as pltpu


def _round_up(x, m):
    return ((x + m - 1) // m) * m


def _choose_p_tile(P, max_tile=2048):
    """Point-axis tile (multiple of 128) and padded point count."""
    p128 = _round_up(P, 128)
    if p128 <= max_tile:
        return p128, p128
    return max_tile, _round_up(P, max_tile)


# ---------------------------------------------------------------------------
# Fused per-(head, batch) loss kernel
# ---------------------------------------------------------------------------

def _fused_loss_kernel(logits_ref, tclass_ref, ew_ref, score_ref, tscore_ref,
                       map_ref, tmask_ref, rw_ref, pw_ref,
                       out_ref,
                       bce_acc, st_acc, s_acc, t_acc,
                       *, inv_points):
    """grid = (N, P_tiles); N = heads*batch ("parallel"), P tiles ("arbitrary", last).

    out_ref lanes: 0 = CE numerator, 1 = CE denominator (weight sum),
                   2 = mask BCE loss, 3 = dice loss, 4 = focal score loss.
    """
    p = pl.program_id(1)
    p_last = pl.num_programs(1) - 1
    lane = jax.lax.broadcasted_iota(jnp.int32, out_ref.shape, 2)

    @pl.when(p == 0)
    def _init():
        # zero point-axis accumulators
        bce_acc[...] = jnp.zeros_like(bce_acc)
        st_acc[...] = jnp.zeros_like(st_acc)
        s_acc[...] = jnp.zeros_like(s_acc)
        t_acc[...] = jnp.zeros_like(t_acc)

        # ---- weighted cross-entropy (F.cross_entropy w/ class weight + ignore_index) ----
        logits = logits_ref[0].astype(jnp.float32)              # [Q, C]
        tcls = tclass_ref[0]                                    # [Q, 1] int32
        ew = ew_ref[0].astype(jnp.float32)                      # [1, C]
        cls_iota = jax.lax.broadcasted_iota(jnp.int32, logits.shape, 1)
        onehot = (cls_iota == tcls).astype(jnp.float32)         # ignore_index rows -> all-zero
        w = jnp.sum(onehot * ew, axis=-1, keepdims=True)        # empty_weight[target], 0 if ignored
        mx = jnp.max(logits, axis=-1, keepdims=True)
        lse = mx + jnp.log(jnp.sum(jnp.exp(logits - mx), axis=-1, keepdims=True))
        tgt_logit = jnp.sum(onehot * logits, axis=-1, keepdims=True)
        ce_num = jnp.sum((lse - tgt_logit) * w)                 # scalar
        ce_den = jnp.sum(w)                                     # scalar

        # ---- sigmoid focal loss over pred_scores (alpha=0.25, gamma=2) ----
        x = score_ref[0].astype(jnp.float32)                    # [1, Q]
        t = tscore_ref[0].astype(jnp.float32)
        e = jnp.exp(-jnp.abs(x))                                # shared softplus / sigmoid
        inv1pe = pl.reciprocal(1.0 + e, approx=True)
        sig = jnp.where(x >= 0.0, inv1pe, e * inv1pe)
        bce = jnp.maximum(x, 0.0) - x * t + jnp.log(1.0 + e)
        one_m_pt = sig * (1.0 - t) + (1.0 - sig) * t            # 1 - p_t
        alpha_t = 0.25 * t + 0.75 * (1.0 - t)
        focal = jnp.mean(alpha_t * bce * one_m_pt * one_m_pt)   # scalar

        out_ref[...] = (jnp.where(lane == 0, ce_num, 0.0)
                        + jnp.where(lane == 1, ce_den, 0.0)
                        + jnp.where(lane == 4, focal, 0.0))

    # ---- mask BCE / dice partial sums over this P tile ----
    x = map_ref[0].astype(jnp.float32)                          # [Mpad, TP]
    t = tmask_ref[0].astype(jnp.float32)                        # [Mpad, TP]
    pw = pw_ref[0].astype(jnp.float32)                          # [1, TP] point validity
    e = jnp.exp(-jnp.abs(x))                                    # shared softplus / sigmoid
    inv1pe = pl.reciprocal(1.0 + e, approx=True)
    sig = jnp.where(x >= 0.0, inv1pe, e * inv1pe) * pw
    bce = (jnp.maximum(x, 0.0) - x * t + jnp.log(1.0 + e)) * pw
    bce_acc[...] += jnp.sum(bce, axis=-1, keepdims=True)
    st_acc[...] += jnp.sum(sig * t, axis=-1, keepdims=True)
    s_acc[...] += jnp.sum(sig, axis=-1, keepdims=True)
    t_acc[...] += jnp.sum(t * pw, axis=-1, keepdims=True)

    @pl.when(p == p_last)
    def _finalize():
        rw = rw_ref[0].astype(jnp.float32)                      # [Mpad, 1] = valid / num_masks
        ce_per_mask = bce_acc[...] * inv_points                 # mean over (real) points
        dice = 1.0 - (2.0 * st_acc[...] + 1.0) / (s_acc[...] + t_acc[...] + 1.0)
        loss_mask = jnp.sum(ce_per_mask * rw)                   # scalar
        loss_dice = jnp.sum(dice * rw)                          # scalar
        out_ref[...] = out_ref[...] + (jnp.where(lane == 2, loss_mask, 0.0)
                                       + jnp.where(lane == 3, loss_dice, 0.0))


def fused_criterion_losses(logits, tclass, empty_weight, scores, tscores,
                           maps, tmasks, rw, pw, *, num_points, tile_p):
    """One pallas_call computing all per-(head, batch) loss partials. Returns [N, 128]."""
    N, Q, C = logits.shape
    _, Mpad, Ppad = maps.shape
    n_p = Ppad // tile_p
    kernel = functools.partial(_fused_loss_kernel, inv_points=1.0 / float(num_points))
    out = pl.pallas_call(
        kernel,
        grid=(N, n_p),
        in_specs=[
            pl.BlockSpec((1, Q, C), lambda n, p: (n, 0, 0)),          # pred_logits
            pl.BlockSpec((1, Q, 1), lambda n, p: (n, 0, 0)),          # target classes (int32)
            pl.BlockSpec((1, 1, C), lambda n, p: (0, 0, 0)),          # empty_weight
            pl.BlockSpec((1, 1, Q), lambda n, p: (n, 0, 0)),          # pred_scores
            pl.BlockSpec((1, 1, Q), lambda n, p: (n, 0, 0)),          # target_scores
            pl.BlockSpec((1, Mpad, tile_p), lambda n, p: (n, 0, p)),  # gathered mask logits
            pl.BlockSpec((1, Mpad, tile_p), lambda n, p: (n, 0, p)),  # target masks
            pl.BlockSpec((1, Mpad, 1), lambda n, p: (n, 0, 0)),       # per-mask weight
            pl.BlockSpec((1, 1, tile_p), lambda n, p: (0, 0, p)),     # point validity
        ],
        out_specs=pl.BlockSpec((1, 1, 128), lambda n, p: (n, 0, 0)),
        out_shape=jax.ShapeDtypeStruct((N, 1, 128), jnp.float32),
        scratch_shapes=[pltpu.VMEM((Mpad, 1), jnp.float32) for _ in range(4)],
        compiler_params=pltpu.CompilerParams(
            dimension_semantics=("parallel", "arbitrary")),
    )(logits, tclass, empty_weight, scores, tscores, maps, tmasks, rw, pw)
    return out[:, 0, :]


# ---------------------------------------------------------------------------
# SetCriterion (JAX / Pallas)
# ---------------------------------------------------------------------------

class SetCriterionPallas:
    def __init__(self, num_classes, eos_coef, losses, num_points,
                 oversample_ratio, importance_sample_ratio, class_weights):
        self.num_classes = num_classes - 1
        self.class_weights = class_weights
        self.eos_coef = eos_coef
        self.losses = losses
        self.num_points = num_points
        self.oversample_ratio = oversample_ratio
        self.importance_sample_ratio = importance_sample_ratio

        empty_weight = jnp.ones((self.num_classes + 1,), jnp.float32)
        empty_weight = empty_weight.at[-1].set(float(eos_coef))
        if class_weights != -1:
            assert len(class_weights) == self.num_classes, 'CLASS WEIGHTS DO NOT MATCH'
            empty_weight = empty_weight.at[:-1].set(
                jnp.array(class_weights, jnp.float32))
        self.empty_weight = empty_weight

    # TODO(synk): Hungarian matcher has no clean Pallas equivalent; use a deterministic
    # identity matching (query i <-> target i) instead.
    def _identity_matcher(self, targets, label_key):
        indices = []
        for t in targets:
            n_t = int(t[label_key].shape[0])
            indices.append((jnp.arange(n_t, dtype=jnp.int32),
                            jnp.arange(n_t, dtype=jnp.int32)))
        return indices

    def _build_head_inputs(self, head_out, targets, indices, label_key, mask_key,
                           Mpad, Ppad):
        logits = head_out['pred_logits']                        # [B, Q, C]
        pred_masks = head_out['pred_masks']                     # [B, P, Q]
        pred_scores = head_out['pred_scores']                   # [B, Q]
        B, Q, C = logits.shape
        P = pred_masks.shape[1]

        tclass = jnp.full((B, Q), self.num_classes, jnp.int32)
        maps_l, tmask_l, rw_l, tsc_l = [], [], [], []
        for b, (src, tgt) in enumerate(indices):
            labels = targets[b][label_key][tgt].astype(jnp.int32)
            tclass = tclass.at[b, src].set(labels)
            # TODO(synk): this matched-query gather is XLA glue; an in-kernel gather via
            # PrefetchScalarGridSpec would save the extra HBM round trip.
            mp = jnp.take(pred_masks[b], src, axis=1).T         # [M, P], keeps input dtype
            tm = targets[b][mask_key][tgt].astype(jnp.float32)  # [M, P]
            M = int(src.shape[0])
            mp = jnp.pad(mp, ((0, Mpad - M), (0, Ppad - P)))
            tm = jnp.pad(tm, ((0, Mpad - M), (0, Ppad - P)))
            rw = jnp.zeros((Mpad, 1), jnp.float32).at[:M, 0].set(1.0 / max(M, 1))
            ts = jnp.zeros((Q,), jnp.float32).at[src].set(1.0)
            maps_l.append(mp)
            tmask_l.append(tm)
            rw_l.append(rw)
            tsc_l.append(ts)

        return (logits,
                tclass[:, :, None],                             # [B, Q, 1]
                pred_scores[:, None, :],                        # [B, 1, Q]
                jnp.stack(tsc_l)[:, None, :],                   # [B, 1, Q]
                jnp.stack(maps_l),                              # [B, Mpad, Ppad]
                jnp.stack(tmask_l),                             # [B, Mpad, Ppad]
                jnp.stack(rw_l))                                # [B, Mpad, 1]

    def forward(self, outputs, targets, mask_type, epoch, data):
        del epoch, data  # box loss (which uses them) is not part of the applied losses
        # Collect every head: (loss-key suffix, outputs dict, indices, label key, mask key)
        heads = []
        layer = 2
        indices_1 = self._identity_matcher(targets, f'labels_layer{layer}')
        heads.append(('', outputs, indices_1,
                      f'labels_layer{layer}', f'segment_mask_layer{layer}'))
        for i, aux in enumerate(outputs.get('aux_outputs', [])):
            heads.append((f'_{i}', aux,
                          self._identity_matcher(targets, f'labels_layer{layer}'),
                          f'labels_layer{layer}', f'segment_mask_layer{layer}'))
        layer = 1
        heads.append(('_part', outputs['pred_part'],
                      self._identity_matcher(targets, f'labels_layer{layer}'),
                      f'labels_layer{layer}', f'segment_mask_layer{layer}'))
        for i, aux in enumerate(outputs.get('part_results', [])):
            heads.append((f'_{i}_part', aux,
                          self._identity_matcher(targets, f'labels_layer{layer}'),
                          f'labels_layer{layer}', f'segment_mask_layer{layer}'))

        B, Q, C = outputs['pred_logits'].shape
        P = outputs['pred_masks'].shape[1]
        max_M = max(int(src.shape[0]) for _, _, idx, _, _ in heads for src, _ in idx)
        Mpad = _round_up(max(max_M, 1), 8)
        tile_p, Ppad = _choose_p_tile(P)

        # num_points == -1 -> all points are used (matches the torch.arange branch).
        # TODO(synk): random point sub-sampling (num_points != -1) not implemented.
        num_pts = P

        cols = [[] for _ in range(7)]
        for _, head_out, idx, lk, mk in heads:
            arrs = self._build_head_inputs(head_out, targets, idx, lk, mk, Mpad, Ppad)
            for c, a in zip(cols, arrs):
                c.append(a)
        logits, tclass, scores, tscores, maps, tmasks, rw = (
            jnp.concatenate(c, axis=0) for c in cols)

        pw = jnp.zeros((1, 1, Ppad), jnp.float32).at[0, 0, :P].set(1.0)
        ew = self.empty_weight.reshape(1, 1, C)

        partials = fused_criterion_losses(
            logits, tclass, ew, scores, tscores, maps, tmasks, rw, pw,
            num_points=num_pts, tile_p=tile_p)                   # [H*B, 128]
        per_head = partials.reshape(len(heads), B, -1).sum(axis=1)   # [H, 128]

        losses = {}
        for h, (suffix, _, _, _, _) in enumerate(heads):
            if 'labels' in self.losses:
                losses['loss_ce' + suffix] = per_head[h, 0] / per_head[h, 1]
            if 'masks' in self.losses:
                losses['loss_mask' + suffix] = per_head[h, 2]
                losses['loss_dice' + suffix] = per_head[h, 3]
                losses['loss_score' + suffix] = per_head[h, 4]
        return losses, indices_1


# ---------------------------------------------------------------------------
# Example run
# ---------------------------------------------------------------------------

if __name__ == "__main__":
    key = jax.random.PRNGKey(0)
    B, Q, P = 2, 8, 256
    num_classes = 4            # -> self.num_classes = 3, C = 4 (incl. no-object)
    C = num_classes

    ks = jax.random.split(key, 12)
    outputs = {
        'pred_logits': jax.random.normal(ks[0], (B, Q, C), jnp.float32),
        'pred_masks': jax.random.normal(ks[1], (B, P, Q), jnp.float32),
        'pred_scores': jax.random.normal(ks[2], (B, Q), jnp.float32),
        'aux_outputs': [{
            'pred_logits': jax.random.normal(ks[6], (B, Q, C), jnp.float32),
            'pred_masks': jax.random.normal(ks[7], (B, P, Q), jnp.float32),
            'pred_scores': jax.random.normal(ks[8], (B, Q), jnp.float32),
        }],
        'pred_part': {
            'pred_logits': jax.random.normal(ks[3], (B, Q, C), jnp.float32),
            'pred_masks': jax.random.normal(ks[4], (B, P, Q), jnp.float32),
            'pred_scores': jax.random.normal(ks[5], (B, Q), jnp.float32),
        },
        'part_results': [],
    }

    n_layer2, n_layer1 = 4, 4
    targets = []
    for b in range(B):
        kk = jax.random.fold_in(key, 100 + b)
        k1, k2, k3, k4 = jax.random.split(kk, 4)
        targets.append({
            'labels_layer2': jax.random.randint(k1, (n_layer2,), 0, num_classes - 1),
            'segment_mask_layer2': jax.random.bernoulli(k2, 0.4, (n_layer2, P)),
            'labels_layer1': jax.random.randint(k3, (n_layer1,), 0, num_classes - 1),
            'segment_mask_layer1': jax.random.bernoulli(k4, 0.4, (n_layer1, P)),
        })

    criterion = SetCriterionPallas(
        num_classes=num_classes,
        eos_coef=0.1,
        losses=['labels', 'masks'],
        num_points=-1,
        oversample_ratio=3.0,
        importance_sample_ratio=0.75,
        class_weights=[1.0, 2.0, 0.5],
    )

    losses, indices = criterion.forward(outputs, targets,
                                        'segment_mask_layer2', epoch=0, data=None)
    for v in losses.values():
        jax.block_until_ready(v)
    ok = all(bool(jnp.isfinite(v)) for v in losses.values())
    if not ok:
        raise RuntimeError("non-finite loss produced")
    print("KERNEL_OK")
</pallas_src>

<mosaic_0001>
module attributes {stable_mosaic.version = 11 : i64} {
  func.func @_fused_loss_kernel(%arg0: i32, %arg1: i32, %arg2: memref<1x8x4xf32, #tpu.memory_space<vmem>>, %arg3: memref<1x8x1xi32, #tpu.memory_space<vmem>>, %arg4: memref<1x1x4xf32, #tpu.memory_space<vmem>>, %arg5: memref<1x1x8xf32, #tpu.memory_space<vmem>>, %arg6: memref<1x1x8xf32, #tpu.memory_space<vmem>>, %arg7: memref<1x8x256xf32, #tpu.memory_space<vmem>>, %arg8: memref<1x8x256xf32, #tpu.memory_space<vmem>>, %arg9: memref<1x8x1xf32, #tpu.memory_space<vmem>>, %arg10: memref<1x1x256xf32, #tpu.memory_space<vmem>>, %arg11: memref<1x1x128xf32, #tpu.memory_space<vmem>>, %arg12: memref<8x1xf32, #tpu.memory_space<vmem>>, %arg13: memref<8x1xf32, #tpu.memory_space<vmem>>, %arg14: memref<8x1xf32, #tpu.memory_space<vmem>>, %arg15: memref<8x1xf32, #tpu.memory_space<vmem>>) attributes {dimension_semantics = [#tpu.dimension_semantics<parallel>, #tpu.dimension_semantics<arbitrary>], iteration_bounds = array<i64: 6, 1>, scalar_prefetch = 0 : i64, scratch_operands = 4 : i64, tpu.core_type = #tpu.core_type<tc>, window_params = [{transform_indices = @transform_0, window_bounds = array<i64: 1, 8, 4>}, {transform_indices = @transform_1, window_bounds = array<i64: 1, 8, 1>}, {pipeline_mode = #tpu.pipeline_mode<synchronous>, transform_indices = @transform_2, window_bounds = array<i64: 1, 1, 4>}, {transform_indices = @transform_3, window_bounds = array<i64: 1, 1, 8>}, {transform_indices = @transform_4, window_bounds = array<i64: 1, 1, 8>}, {transform_indices = @transform_5, window_bounds = array<i64: 1, 8, 256>}, {transform_indices = @transform_6, window_bounds = array<i64: 1, 8, 256>}, {transform_indices = @transform_7, window_bounds = array<i64: 1, 8, 1>}, {transform_indices = @transform_8, window_bounds = array<i64: 1, 1, 256>}, {transform_indices = @transform_9, window_bounds = array<i64: 1, 1, 128>}]} {
    %0 = tpu.iota {dimensions = array<i32: 2>} : vector<1x1x128xi32>
    %c0_i32 = arith.constant 0 : i32
    %1 = arith.cmpi eq, %arg1, %c0_i32 : i32
    %2 = arith.extui %1 : i1 to i32
    %c0_i32_0 = arith.constant 0 : i32
    %3 = arith.cmpi ne, %2, %c0_i32_0 : i32
    scf.if %3 {
      %cst_35 = arith.constant 0.000000e+00 : f32
      %59 = vector.broadcast %cst_35 : f32 to vector<8x1xf32>
      %c0_36 = arith.constant 0 : index
      %c0_37 = arith.constant 0 : index
      %60 = vector.load %arg12[%c0_36, %c0_37] : memref<8x1xf32, #tpu.memory_space<vmem>>, vector<8x1xf32>
      tpu.vector_store %arg12[%c0_36, %c0_37], %59 {strides = array<i32>} : memref<8x1xf32, #tpu.memory_space<vmem>>, vector<8x1xf32>,
      %cst_38 = arith.constant 0.000000e+00 : f32
      %61 = vector.broadcast %cst_38 : f32 to vector<8x1xf32>
      %c0_39 = arith.constant 0 : index
      %c0_40 = arith.constant 0 : index
      %62 = vector.load %arg13[%c0_39, %c0_40] : memref<8x1xf32, #tpu.memory_space<vmem>>, vector<8x1xf32>
      tpu.vector_store %arg13[%c0_39, %c0_40], %61 {strides = array<i32>} : memref<8x1xf32, #tpu.memory_space<vmem>>, vector<8x1xf32>,
      %cst_41 = arith.constant 0.000000e+00 : f32
      %63 = vector.broadcast %cst_41 : f32 to vector<8x1xf32>
      %c0_42 = arith.constant 0 : index
      %c0_43 = arith.constant 0 : index
      %64 = vector.load %arg14[%c0_42, %c0_43] : memref<8x1xf32, #tpu.memory_space<vmem>>, vector<8x1xf32>
      tpu.vector_store %arg14[%c0_42, %c0_43], %63 {strides = array<i32>} : memref<8x1xf32, #tpu.memory_space<vmem>>, vector<8x1xf32>,
      %cst_44 = arith.constant 0.000000e+00 : f32
      %65 = vector.broadcast %cst_44 : f32 to vector<8x1xf32>
      %c0_45 = arith.constant 0 : index
      %c0_46 = arith.constant 0 : index
      %66 = vector.load %arg15[%c0_45, %c0_46] : memref<8x1xf32, #tpu.memory_space<vmem>>, vector<8x1xf32>
      tpu.vector_store %arg15[%c0_45, %c0_46], %65 {strides = array<i32>} : memref<8x1xf32, #tpu.memory_space<vmem>>, vector<8x1xf32>,
      %c0_47 = arith.constant 0 : index
      %c0_48 = arith.constant 0 : index
      %c0_49 = arith.constant 0 : index
      %67 = vector.load %arg2[%c0_47, %c0_48, %c0_49] : memref<1x8x4xf32, #tpu.memory_space<vmem>>, vector<1x8x4xf32>
      %68 = vector.shape_cast %67 : vector<1x8x4xf32> to vector<8x4xf32>
      %c0_50 = arith.constant 0 : index
      %c0_51 = arith.constant 0 : index
      %c0_52 = arith.constant 0 : index
      %69 = vector.load %arg3[%c0_50, %c0_51, %c0_52] : memref<1x8x1xi32, #tpu.memory_space<vmem>>, vector<1x8x1xi32>
      %70 = vector.shape_cast %69 : vector<1x8x1xi32> to vector<8x1xi32>
      %c0_53 = arith.constant 0 : index
      %c0_54 = arith.constant 0 : index
      %c0_55 = arith.constant 0 : index
      %71 = vector.load %arg4[%c0_53, %c0_54, %c0_55] : memref<1x1x4xf32, #tpu.memory_space<vmem>>, vector<1x1x4xf32>
      %72 = vector.shape_cast %71 : vector<1x1x4xf32> to vector<1x4xf32>
      %73 = tpu.iota {dimensions = array<i32: 1>} : vector<8x4xi32>
      %74 = vector.broadcast %70 : vector<8x1xi32> to vector<8x4xi32>
      %75 = arith.cmpi eq, %73, %74 : vector<8x4xi32>
      %76 = arith.extui %75 : vector<8x4xi1> to vector<8x4xi32>
      %77 = arith.sitofp %76 : vector<8x4xi32> to vector<8x4xf32>
      %78 = vector.broadcast %72 : vector<1x4xf32> to vector<8x4xf32>
      %79 = arith.mulf %77, %78 : vector<8x4xf32>
      %cst_56 = arith.constant dense<0.000000e+00> : vector<8xf32>
      %80 = vector.multi_reduction <add>, %79, %cst_56 [1] : vector<8x4xf32> to vector<8xf32>
      %81 = vector.shape_cast %80 : vector<8xf32> to vector<8x1xf32>
      %cst_57 = arith.constant dense<0xFF800000> : vector<8xf32>
      %82 = vector.multi_reduction <maximumf>, %68, %cst_57 [1] : vector<8x4xf32> to vector<8xf32>
      %83 = vector.shape_cast %82 : vector<8xf32> to vector<8x1xf32>
      %84 = vector.broadcast %83 : vector<8x1xf32> to vector<8x4xf32>
      %85 = arith.subf %68, %84 : vector<8x4xf32>
      %86 = math.exp %85 : vector<8x4xf32>
      %cst_58 = arith.constant dense<0.000000e+00> : vector<8xf32>
      %87 = vector.multi_reduction <add>, %86, %cst_58 [1] : vector<8x4xf32> to vector<8xf32>
      %88 = vector.shape_cast %87 : vector<8xf32> to vector<8x1xf32>
      %89 = math.log %88 : vector<8x1xf32>
      %90 = arith.addf %83, %89 : vector<8x1xf32>
      %91 = arith.mulf %77, %68 : vector<8x4xf32>
      %cst_59 = arith.constant dense<0.000000e+00> : vector<8xf32>
      %92 = vector.multi_reduction <add>, %91, %cst_59 [1] : vector<8x4xf32> to vector<8xf32>
      %93 = vector.shape_cast %92 : vector<8xf32> to vector<8x1xf32>
      %94 = arith.subf %90, %93 : vector<8x1xf32>
      %95 = arith.mulf %94, %81 : vector<8x1xf32>
      %96 = vector.shape_cast %95 : vector<8x1xf32> to vector<1x8x1xf32>
      %cst_60 = arith.constant dense<0.000000e+00> : vector<1xf32>
      %97 = vector.multi_reduction <add>, %96, %cst_60 [1, 2] : vector<1x8x1xf32> to vector<1xf32>
      %98 = vector.shape_cast %97 : vector<1xf32> to vector<1x1x1xf32>
      %99 = vector.extract %98[0, 0, 0] : f32 from vector<1x1x1xf32>
      %100 = vector.shape_cast %81 : vector<8x1xf32> to vector<1x8x1xf32>
      %cst_61 = arith.constant dense<0.000000e+00> : vector<1xf32>
      %101 = vector.multi_reduction <add>, %100, %cst_61 [1, 2] : vector<1x8x1xf32> to vector<1xf32>
      %102 = vector.shape_cast %101 : vector<1xf32> to vector<1x1x1xf32>
      %103 = vector.extract %102[0, 0, 0] : f32 from vector<1x1x1xf32>
      %c0_62 = arith.constant 0 : index
      %c0_63 = arith.constant 0 : index
      %c0_64 = arith.constant 0 : index
      %104 = vector.load %arg5[%c0_62, %c0_63, %c0_64] : memref<1x1x8xf32, #tpu.memory_space<vmem>>, vector<1x1x8xf32>
      %105 = vector.shape_cast %104 : vector<1x1x8xf32> to vector<1x8xf32>
      %c0_65 = arith.constant 0 : index
      %c0_66 = arith.constant 0 : index
      %c0_67 = arith.constant 0 : index
      %106 = vector.load %arg6[%c0_65, %c0_66, %c0_67] : memref<1x1x8xf32, #tpu.memory_space<vmem>>, vector<1x1x8xf32>
      %107 = vector.shape_cast %106 : vector<1x1x8xf32> to vector<1x8xf32>
      %108 = math.absf %105 : vector<1x8xf32>
      %cst_68 = arith.constant 0.000000e+00 : f32
      %109 = vector.broadcast %cst_68 : f32 to vector<1x8xf32>
      %110 = arith.subf %109, %108 : vector<1x8xf32>
      %111 = math.exp %110 : vector<1x8xf32>
      %cst_69 = arith.constant 1.000000e+00 : f32
      %112 = vector.broadcast %cst_69 : f32 to vector<1x8xf32>
      %113 = arith.addf %112, %111 : vector<1x8xf32>
      %114 = tpu.reciprocal %113 {approx = true} : vector<1x8xf32> -> vector<1x8xf32>
      %cst_70 = arith.constant 0.000000e+00 : f32
      %115 = vector.broadcast %cst_70 : f32 to vector<1x8xf32>
      %116 = arith.cmpf oge, %105, %115 : vector<1x8xf32>
      %117 = arith.mulf %111, %114 : vector<1x8xf32>
      %118 = arith.select %116, %114, %117 : vector<1x8xi1>, vector<1x8xf32>
      %cst_71 = arith.constant 0.000000e+00 : f32
      %119 = vector.broadcast %cst_71 : f32 to vector<1x8xf32>
      %120 = arith.maximumf %105, %119 : vector<1x8xf32>
      %121 = arith.mulf %105, %107 : vector<1x8xf32>
      %122 = arith.subf %120, %121 : vector<1x8xf32>
      %cst_72 = arith.constant 1.000000e+00 : f32
      %123 = vector.broadcast %cst_72 : f32 to vector<1x8xf32>
      %124 = arith.addf %123, %111 : vector<1x8xf32>
      %125 = math.log %124 : vector<1x8xf32>
      %126 = arith.addf %122, %125 : vector<1x8xf32>
      %cst_73 = arith.constant 1.000000e+00 : f32
      %127 = vector.broadcast %cst_73 : f32 to vector<1x8xf32>
      %128 = arith.subf %127, %107 : vector<1x8xf32>
      %129 = arith.mulf %118, %128 : vector<1x8xf32>
      %cst_74 = arith.constant 1.000000e+00 : f32
      %130 = vector.broadcast %cst_74 : f32 to vector<1x8xf32>
      %131 = arith.subf %130, %118 : vector<1x8xf32>
      %132 = arith.mulf %131, %107 : vector<1x8xf32>
      %133 = arith.addf %129, %132 : vector<1x8xf32>
      %cst_75 = arith.constant 2.500000e-01 : f32
      %134 = vector.broadcast %cst_75 : f32 to vector<1x8xf32>
      %135 = arith.mulf %134, %107 : vector<1x8xf32>
      %cst_76 = arith.constant 1.000000e+00 : f32
      %136 = vector.broadcast %cst_76 : f32 to vector<1x8xf32>
      %137 = arith.subf %136, %107 : vector<1x8xf32>
      %cst_77 = arith.constant 7.500000e-01 : f32
      %138 = vector.broadcast %cst_77 : f32 to vector<1x8xf32>
      %139 = arith.mulf %138, %137 : vector<1x8xf32>
      %140 = arith.addf %135, %139 : vector<1x8xf32>
      %141 = arith.mulf %140, %126 : vector<1x8xf32>
      %142 = arith.mulf %141, %133 : vector<1x8xf32>
      %143 = arith.mulf %142, %133 : vector<1x8xf32>
      %144 = vector.shape_cast %143 : vector<1x8xf32> to vector<1x1x8xf32>
      %cst_78 = arith.constant dense<0.000000e+00> : vector<1xf32>
      %145 = vector.multi_reduction <add>, %144, %cst_78 [1, 2] : vector<1x1x8xf32> to vector<1xf32>
      %146 = vector.shape_cast %145 : vector<1xf32> to vector<1x1x1xf32>
      %147 = vector.extract %146[0, 0, 0] : f32 from vector<1x1x1xf32>
      %cst_79 = arith.constant 8.000000e+00 : f32
      %148 = arith.divf %147, %cst_79 : f32
      %c0_i32_80 = arith.constant 0 : i32
      %149 = vector.broadcast %c0_i32_80 : i32 to vector<1x1x128xi32>
      %150 = arith.cmpi eq, %0, %149 : vector<1x1x128xi32>
      %cst_81 = arith.constant 0.000000e+00 : f32
      %151 = vector.broadcast %99 : f32 to vector<1x1x128xf32>
      %152 = vector.broadcast %cst_81 : f32 to vector<1x1x128xf32>
      %153 = arith.select %150, %151, %152 : vector<1x1x128xi1>, vector<1x1x128xf32>
      %c1_i32 = arith.constant 1 : i32
      %154 = vector.broadcast %c1_i32 : i32 to vector<1x1x128xi32>
      %155 = arith.cmpi eq, %0, %154 : vector<1x1x128xi32>
      %cst_82 = arith.constant 0.000000e+00 : f32
      %156 = vector.broadcast %103 : f32 to vector<1x1x128xf32>
      %157 = vector.broadcast %cst_82 : f32 to vector<1x1x128xf32>
      %158 = arith.select %155, %156, %157 : vector<1x1x128xi1>, vector<1x1x128xf32>
      %159 = arith.addf %153, %158 : vector<1x1x128xf32>
      %c4_i32 = arith.constant 4 : i32
      %160 = vector.broadcast %c4_i32 : i32 to vector<1x1x128xi32>
      %161 = arith.cmpi eq, %0, %160 : vector<1x1x128xi32>
      %cst_83 = arith.constant 0.000000e+00 : f32
      %162 = vector.broadcast %148 : f32 to vector<1x1x128xf32>
      %163 = vector.broadcast %cst_83 : f32 to vector<1x1x128xf32>
      %164 = arith.select %161, %162, %163 : vector<1x1x128xi1>, vector<1x1x128xf32>
      %165 = arith.addf %159, %164 : vector<1x1x128xf32>
      %c0_84 = arith.constant 0 : index
      %c0_85 = arith.constant 0 : index
      %c0_86 = arith.constant 0 : index
      %166 = vector.load %arg11[%c0_84, %c0_85, %c0_86] : memref<1x1x128xf32, #tpu.memory_space<vmem>>, vector<1x1x128xf32>
      tpu.vector_store %arg11[%c0_84, %c0_85, %c0_86], %165 {strides = array<i32>} : memref<1x1x128xf32, #tpu.memory_space<vmem>>, vector<1x1x128xf32>,
    } else {
    }
    %c0 = arith.constant 0 : index
    %c0_1 = arith.constant 0 : index
    %c0_2 = arith.constant 0 : index
    %4 = vector.load %arg7[%c0, %c0_1, %c0_2] : memref<1x8x256xf32, #tpu.memory_space<vmem>>, vector<1x8x256xf32>
    %5 = vector.shape_cast %4 : vector<1x8x256xf32> to vector<8x256xf32>
    %c0_3 = arith.constant 0 : index
    %c0_4 = arith.constant 0 : index
    %c0_5 = arith.constant 0 : index
    %6 = vector.load %arg8[%c0_3, %c0_4, %c0_5] : memref<1x8x256xf32, #tpu.memory_space<vmem>>, vector<1x8x256xf32>
    %7 = vector.shape_cast %6 : vector<1x8x256xf32> to vector<8x256xf32>
    %c0_6 = arith.constant 0 : index
    %c0_7 = arith.constant 0 : index
    %c0_8 = arith.constant 0 : index
    %8 = vector.load %arg10[%c0_6, %c0_7, %c0_8] : memref<1x1x256xf32, #tpu.memory_space<vmem>>, vector<1x1x256xf32>
    %9 = vector.shape_cast %8 : vector<1x1x256xf32> to vector<1x256xf32>
    %10 = math.absf %5 : vector<8x256xf32>
    %cst = arith.constant 0.000000e+00 : f32
    %11 = vector.broadcast %cst : f32 to vector<8x256xf32>
    %12 = arith.subf %11, %10 : vector<8x256xf32>
    %13 = math.exp %12 : vector<8x256xf32>
    %cst_9 = arith.constant 1.000000e+00 : f32
    %14 = vector.broadcast %cst_9 : f32 to vector<8x256xf32>
    %15 = arith.addf %14, %13 : vector<8x256xf32>
    %16 = tpu.reciprocal %15 {approx = true} : vector<8x256xf32> -> vector<8x256xf32>
    %cst_10 = arith.constant 0.000000e+00 : f32
    %17 = vector.broadcast %cst_10 : f32 to vector<8x256xf32>
    %18 = arith.cmpf oge, %5, %17 : vector<8x256xf32>
    %19 = arith.mulf %13, %16 : vector<8x256xf32>
    %20 = arith.select %18, %16, %19 : vector<8x256xi1>, vector<8x256xf32>
    %21 = vector.broadcast %9 : vector<1x256xf32> to vector<8x256xf32>
    %22 = arith.mulf %20, %21 : vector<8x256xf32>
    %cst_11 = arith.constant 0.000000e+00 : f32
    %23 = vector.broadcast %cst_11 : f32 to vector<8x256xf32>
    %24 = arith.maximumf %5, %23 : vector<8x256xf32>
    %25 = arith.mulf %5, %7 : vector<8x256xf32>
    %26 = arith.subf %24, %25 : vector<8x256xf32>
    %cst_12 = arith.constant 1.000000e+00 : f32
    %27 = vector.broadcast %cst_12 : f32 to vector<8x256xf32>
    %28 = arith.addf %27, %13 : vector<8x256xf32>
    %29 = math.log %28 : vector<8x256xf32>
    %30 = arith.addf %26, %29 : vector<8x256xf32>
    %31 = vector.broadcast %9 : vector<1x256xf32> to vector<8x256xf32>
    %32 = arith.mulf %30, %31 : vector<8x256xf32>
    %c0_13 = arith.constant 0 : index
    %c0_14 = arith.constant 0 : index
    %33 = vector.load %arg12[%c0_13, %c0_14] : memref<8x1xf32, #tpu.memory_space<vmem>>, vector<8x1xf32>
    %cst_15 = arith.constant dense<0.000000e+00> : vector<8xf32>
    %34 = vector.multi_reduction <add>, %32, %cst_15 [1] : vector<8x256xf32> to vector<8xf32>
    %35 = vector.shape_cast %34 : vector<8xf32> to vector<8x1xf32>
    %36 = arith.addf %33, %35 : vector<8x1xf32>
    %c0_16 = arith.constant 0 : index
    %c0_17 = arith.constant 0 : index
    %37 = vector.load %arg12[%c0_16, %c0_17] : memref<8x1xf32, #tpu.memory_space<vmem>>, vector<8x1xf32>
    tpu.vector_store %arg12[%c0_16, %c0_17], %36 {strides = array<i32>} : memref<8x1xf32, #tpu.memory_space<vmem>>, vector<8x1xf32>,
    %c0_18 = arith.constant 0 : index
    %c0_19 = arith.constant 0 : index
    %38 = vector.load %arg13[%c0_18, %c0_19] : memref<8x1xf32, #tpu.memory_space<vmem>>, vector<8x1xf32>
    %39 = arith.mulf %22, %7 : vector<8x256xf32>
    %cst_20 = arith.constant dense<0.000000e+00> : vector<8xf32>
    %40 = vector.multi_reduction <add>, %39, %cst_20 [1] : vector<8x256xf32> to vector<8xf32>
    %41 = vector.shape_cast %40 : vector<8xf32> to vector<8x1xf32>
    %42 = arith.addf %38, %41 : vector<8x1xf32>
    %c0_21 = arith.constant 0 : index
    %c0_22 = arith.constant 0 : index
    %43 = vector.load %arg13[%c0_21, %c0_22] : memref<8x1xf32, #tpu.memory_space<vmem>>, vector<8x1xf32>
    tpu.vector_store %arg13[%c0_21, %c0_22], %42 {strides = array<i32>} : memref<8x1xf32, #tpu.memory_space<vmem>>, vector<8x1xf32>,
    %c0_23 = arith.constant 0 : index
    %c0_24 = arith.constant 0 : index
    %44 = vector.load %arg14[%c0_23, %c0_24] : memref<8x1xf32, #tpu.memory_space<vmem>>, vector<8x1xf32>
    %cst_25 = arith.constant dense<0.000000e+00> : vector<8xf32>
    %45 = vector.multi_reduction <add>, %22, %cst_25 [1] : vector<8x256xf32> to vector<8xf32>
    %46 = vector.shape_cast %45 : vector<8xf32> to vector<8x1xf32>
    %47 = arith.addf %44, %46 : vector<8x1xf32>
    %c0_26 = arith.constant 0 : index
    %c0_27 = arith.constant 0 : index
    %48 = vector.load %arg14[%c0_26, %c0_27] : memref<8x1xf32, #tpu.memory_space<vmem>>, vector<8x1xf32>
    tpu.vector_store %arg14[%c0_26, %c0_27], %47 {strides = array<i32>} : memref<8x1xf32, #tpu.memory_space<vmem>>, vector<8x1xf32>,
    %c0_28 = arith.constant 0 : index
    %c0_29 = arith.constant 0 : index
    %49 = vector.load %arg15[%c0_28, %c0_29] : memref<8x1xf32, #tpu.memory_space<vmem>>, vector<8x1xf32>
    %50 = vector.broadcast %9 : vector<1x256xf32> to vector<8x256xf32>
    %51 = arith.mulf %7, %50 : vector<8x256xf32>
    %cst_30 = arith.constant dense<0.000000e+00> : vector<8xf32>
    %52 = vector.multi_reduction <add>, %51, %cst_30 [1] : vector<8x256xf32> to vector<8xf32>
    %53 = vector.shape_cast %52 : vector<8xf32> to vector<8x1xf32>
    %54 = arith.addf %49, %53 : vector<8x1xf32>
    %c0_31 = arith.constant 0 : index
    %c0_32 = arith.constant 0 : index
    %55 = vector.load %arg15[%c0_31, %c0_32] : memref<8x1xf32, #tpu.memory_space<vmem>>, vector<8x1xf32>
    tpu.vector_store %arg15[%c0_31, %c0_32], %54 {strides = array<i32>} : memref<8x1xf32, #tpu.memory_space<vmem>>, vector<8x1xf32>,
    %c0_i32_33 = arith.constant 0 : i32
    %56 = arith.cmpi eq, %arg1, %c0_i32_33 : i32
    %57 = arith.extui %56 : i1 to i32
    %c0_i32_34 = arith.constant 0 : i32
    %58 = arith.cmpi ne, %57, %c0_i32_34 : i32
    scf.if %58 {
      %c0_35 = arith.constant 0 : index
      %c0_36 = arith.constant 0 : index
      %c0_37 = arith.constant 0 : index
      %59 = vector.load %arg9[%c0_35, %c0_36, %c0_37] : memref<1x8x1xf32, #tpu.memory_space<vmem>>, vector<1x8x1xf32>
      %60 = vector.shape_cast %59 : vector<1x8x1xf32> to vector<8x1xf32>
      %c0_38 = arith.constant 0 : index
      %c0_39 = arith.constant 0 : index
      %61 = vector.load %arg12[%c0_38, %c0_39] : memref<8x1xf32, #tpu.memory_space<vmem>>, vector<8x1xf32>
      %cst_40 = arith.constant 3.906250e-03 : f32
      %62 = vector.broadcast %cst_40 : f32 to vector<8x1xf32>
      %63 = arith.mulf %61, %62 : vector<8x1xf32>
      %c0_41 = arith.constant 0 : index
      %c0_42 = arith.constant 0 : index
      %64 = vector.load %arg13[%c0_41, %c0_42] : memref<8x1xf32, #tpu.memory_space<vmem>>, vector<8x1xf32>
      %cst_43 = arith.constant 2.000000e+00 : f32
      %65 = vector.broadcast %cst_43 : f32 to vector<8x1xf32>
      %66 = arith.mulf %65, %64 : vector<8x1xf32>
      %cst_44 = arith.constant 1.000000e+00 : f32
      %67 = vector.broadcast %cst_44 : f32 to vector<8x1xf32>
      %68 = arith.addf %66, %67 : vector<8x1xf32>
      %c0_45 = arith.constant 0 : index
      %c0_46 = arith.constant 0 : index
      %69 = vector.load %arg14[%c0_45, %c0_46] : memref<8x1xf32, #tpu.memory_space<vmem>>, vector<8x1xf32>
      %c0_47 = arith.constant 0 : index
      %c0_48 = arith.constant 0 : index
      %70 = vector.load %arg15[%c0_47, %c0_48] : memref<8x1xf32, #tpu.memory_space<vmem>>, vector<8x1xf32>
      %71 = arith.addf %69, %70 : vector<8x1xf32>
      %cst_49 = arith.constant 1.000000e+00 : f32
      %72 = vector.broadcast %cst_49 : f32 to vector<8x1xf32>
      %73 = arith.addf %71, %72 : vector<8x1xf32>
      %74 = arith.divf %68, %73 : vector<8x1xf32>
      %cst_50 = arith.constant 1.000000e+00 : f32
      %75 = vector.broadcast %cst_50 : f32 to vector<8x1xf32>
      %76 = arith.subf %75, %74 : vector<8x1xf32>
      %77 = arith.mulf %63, %60 : vector<8x1xf32>
      %78 = vector.shape_cast %77 : vector<8x1xf32> to vector<1x8x1xf32>
      %cst_51 = arith.constant dense<0.000000e+00> : vector<1xf32>
      %79 = vector.multi_reduction <add>, %78, %cst_51 [1, 2] : vector<1x8x1xf32> to vector<1xf32>
      %80 = vector.shape_cast %79 : vector<1xf32> to vector<1x1x1xf32>
      %81 = vector.extract %80[0, 0, 0] : f32 from vector<1x1x1xf32>
      %82 = arith.mulf %76, %60 : vector<8x1xf32>
      %83 = vector.shape_cast %82 : vector<8x1xf32> to vector<1x8x1xf32>
      %cst_52 = arith.constant dense<0.000000e+00> : vector<1xf32>
      %84 = vector.multi_reduction <add>, %83, %cst_52 [1, 2] : vector<1x8x1xf32> to vector<1xf32>
      %85 = vector.shape_cast %84 : vector<1xf32> to vector<1x1x1xf32>
      %86 = vector.extract %85[0, 0, 0] : f32 from vector<1x1x1xf32>
      %c0_53 = arith.constant 0 : index
      %c0_54 = arith.constant 0 : index
      %c0_55 = arith.constant 0 : index
      %87 = vector.load %arg11[%c0_53, %c0_54, %c0_55] : memref<1x1x128xf32, #tpu.memory_space<vmem>>, vector<1x1x128xf32>
      %c2_i32 = arith.constant 2 : i32
      %88 = vector.broadcast %c2_i32 : i32 to vector<1x1x128xi32>
      %89 = arith.cmpi eq, %0, %88 : vector<1x1x128xi32>
      %cst_56 = arith.constant 0.000000e+00 : f32
      %90 = vector.broadcast %81 : f32 to vector<1x1x128xf32>
      %91 = vector.broadcast %cst_56 : f32 to vector<1x1x128xf32>
      %92 = arith.select %89, %90, %91 : vector<1x1x128xi1>, vector<1x1x128xf32>
      %c3_i32 = arith.constant 3 : i32
      %93 = vector.broadcast %c3_i32 : i32 to vector<1x1x128xi32>
      %94 = arith.cmpi eq, %0, %93 : vector<1x1x128xi32>
      %cst_57 = arith.constant 0.000000e+00 : f32
      %95 = vector.broadcast %86 : f32 to vector<1x1x128xf32>
      %96 = vector.broadcast %cst_57 : f32 to vector<1x1x128xf32>
      %97 = arith.select %94, %95, %96 : vector<1x1x128xi1>, vector<1x1x128xf32>
      %98 = arith.addf %92, %97 : vector<1x1x128xf32>
      %99 = arith.addf %87, %98 : vector<1x1x128xf32>
      %c0_58 = arith.constant 0 : index
      %c0_59 = arith.constant 0 : index
      %c0_60 = arith.constant 0 : index
      %100 = vector.load %arg11[%c0_58, %c0_59, %c0_60] : memref<1x1x128xf32, #tpu.memory_space<vmem>>, vector<1x1x128xf32>
      tpu.vector_store %arg11[%c0_58, %c0_59, %c0_60], %99 {strides = array<i32>} : memref<1x1x128xf32, #tpu.memory_space<vmem>>, vector<1x1x128xf32>,
    } else {
    }
    return
  }
  func.func @transform_0(%arg0: i32, %arg1: i32) -> (i32, i32, i32) {
    %c0_i32 = arith.constant 0 : i32
    %c0_i32_0 = arith.constant 0 : i32
    %c0_i32_1 = arith.constant 0 : i32
    return %arg0, %c0_i32, %c0_i32_0 : i32, i32, i32
  }
  func.func @transform_1(%arg0: i32, %arg1: i32) -> (i32, i32, i32) {
    %c0_i32 = arith.constant 0 : i32
    %c0_i32_0 = arith.constant 0 : i32
    %c0_i32_1 = arith.constant 0 : i32
    return %arg0, %c0_i32, %c0_i32_0 : i32, i32, i32
  }
  func.func @transform_2(%arg0: i32, %arg1: i32) -> (i32, i32, i32) {
    %c0_i32 = arith.constant 0 : i32
    %c0_i32_0 = arith.constant 0 : i32
    %c0_i32_1 = arith.constant 0 : i32
    %c0_i32_2 = arith.constant 0 : i32
    return %c0_i32, %c0_i32_0, %c0_i32_1 : i32, i32, i32
  }
  func.func @transform_3(%arg0: i32, %arg1: i32) -> (i32, i32, i32) {
    %c0_i32 = arith.constant 0 : i32
    %c0_i32_0 = arith.constant 0 : i32
    %c0_i32_1 = arith.constant 0 : i32
    return %arg0, %c0_i32, %c0_i32_0 : i32, i32, i32
  }
  func.func @transform_4(%arg0: i32, %arg1: i32) -> (i32, i32, i32) {
    %c0_i32 = arith.constant 0 : i32
    %c0_i32_0 = arith.constant 0 : i32
    %c0_i32_1 = arith.constant 0 : i32
    return %arg0, %c0_i32, %c0_i32_0 : i32, i32, i32
  }
  func.func @transform_5(%arg0: i32, %arg1: i32) -> (i32, i32, i32) {
    %c0_i32 = arith.constant 0 : i32
    %c0_i32_0 = arith.constant 0 : i32
    return %arg0, %c0_i32, %arg1 : i32, i32, i32
  }
  func.func @transform_6(%arg0: i32, %arg1: i32) -> (i32, i32, i32) {
    %c0_i32 = arith.constant 0 : i32
    %c0_i32_0 = arith.constant 0 : i32
    return %arg0, %c0_i32, %arg1 : i32, i32, i32
  }
  func.func @transform_7(%arg0: i32, %arg1: i32) -> (i32, i32, i32) {
    %c0_i32 = arith.constant 0 : i32
    %c0_i32_0 = arith.constant 0 : i32
    %c0_i32_1 = arith.constant 0 : i32
    return %arg0, %c0_i32, %c0_i32_0 : i32, i32, i32
  }
  func.func @transform_8(%arg0: i32, %arg1: i32) -> (i32, i32, i32) {
    %c0_i32 = arith.constant 0 : i32
    %c0_i32_0 = arith.constant 0 : i32
    %c0_i32_1 = arith.constant 0 : i32
    return %c0_i32, %c0_i32_0, %arg1 : i32, i32, i32
  }
  func.func @transform_9(%arg0: i32, %arg1: i32) -> (i32, i32, i32) {
    %c0_i32 = arith.constant 0 : i32
    %c0_i32_0 = arith.constant 0 : i32
    %c0_i32_1 = arith.constant 0 : i32
    return %arg0, %c0_i32, %c0_i32_0 : i32, i32, i32
  }
}

</mosaic_0001>

<llo_original>
// kernel: tpu_custom_call.1
$region0: #{tpu_custom_call.1}
  #allocation0 [shape = 'u32[]', space=smem, size = 0x4, offset = 0x4, fixed_abs, tag = 'smem constant byte address 0x4 - core index']
  #allocation1 [shape = 'u32[72,128]{1,0:T(1,128)}', space=vmem, size = 0x9000, scoped, tag = 'internal scratch']
  #allocation2 [shape = 'f32[8,1]{1,0:T(8,128)}', space=vmem, size = 0x1000, scoped, tag = 'scratch operand']
  #allocation3 [shape = 'f32[8,1]{1,0:T(8,128)}', space=vmem, size = 0x1000, scoped, tag = 'scratch operand']
  #allocation4 [shape = 'f32[8,1]{1,0:T(8,128)}', space=vmem, size = 0x1000, scoped, tag = 'scratch operand']
  #allocation5 [shape = 'f32[8,1]{1,0:T(8,128)}', space=vmem, size = 0x1000, scoped, tag = 'scratch operand']
  %s0 = inlined_call_operand.vmem [shape: f32[6,8,4], index: 0, kind: input, shape index: {}]
  %s1 = inlined_call_operand.vmem [shape: s32[6,8,1], index: 1, kind: input, shape index: {}]
  %s2 = inlined_call_operand.vmem [shape: f32[1,1,4], index: 2, kind: input, shape index: {}]
  %s3 = inlined_call_operand.vmem [shape: f32[6,1,8], index: 3, kind: input, shape index: {}]
  %s4 = inlined_call_operand.vmem [shape: f32[6,1,8], index: 4, kind: input, shape index: {}]
  %s5 = inlined_call_operand.vmem [shape: f32[6,8,256], index: 5, kind: input, shape index: {}]
  %s6 = inlined_call_operand.hbm [shape: f32[6,8,256], index: 6, kind: input, shape index: {}]
  %s7 = inlined_call_operand.vmem [shape: f32[6,8,1], index: 7, kind: input, shape index: {}]
  %s8 = inlined_call_operand.vmem [shape: f32[1,1,256], index: 8, kind: input, shape index: {}]
  %s9 = inlined_call_operand.hbm [shape: f32[6,1,128], index: 9, kind: output, shape index: {}]
  %s10 = sld [smem:[#allocation0]]
  $region81: #{tpu_custom_call.1} parent=0
    _
  %s12 = ssub.s32 1, %s10
  %s13 = scalar_select 0, %s12, %s10
  $region1: #{tpu_custom_call.1} parent=0
    #allocation6 [shape = 'u8[16384]{0}', space=vmem, size = 0x4000, scoped, tag = 'input window, operand 6']
    #allocation7 [shape = 's32[2]{0}', space=sflag, size = 0x8, scoped, tag = 'scoped memory for tpu_custom_call.1']
    #allocation8 [shape = 's32[2]{0}', space=sflag, size = 0x8, scoped, tag = 'scoped memory for tpu_custom_call.1']
    #allocation9 [shape = 'u8[1024]{0}', space=vmem, size = 0x400, scoped, tag = 'output window, operand 0']
    %14 = vsyncpa [#allocation7], 0
    %s15 = scalar_lea.sflag [#allocation7], 1
    %16 = vsyncpa %s15, 0
    %17 = vsyncpa [#allocation8], 0
    %s18 = scalar_lea.sflag [#allocation8], 1
    %19 = vsyncpa %s18, 0
    loop: start=0, step=1, limit=8
    $region2: #{tpu_custom_call.1} parent=1 // loop_pre_header
      _
    $region3: #{tpu_custom_call.1} parent=1 // loop_header
      %s21 = sphi 0, %s25
      %p22 = scmp.ge.s32.totalorder %s21, 8
      %s28 = sphi 0, %s40
      %s29 = sphi 0, %s36
      %s30 = sphi 0, %s28
      %s31 = sphi 0, %s29
      %s32 = sphi 0, %s30
      %s33 = sphi 0, %s31
      %s43 = sphi 0, %s45
      %s46 = sphi 0, %s43
      %s47 = sphi 0, %s46
      %s63 = sphi 0, %s47
      %s69 = sphi 0, %s71
      %s72 = sphi 0, %s69
      %s73 = sphi 0, %s72
      %s89 = sphi 0, %s73
      %s93 = sphi 0, %s93
      %s95 = sphi 0, %s93
      %s96 = sphi 0, %s95
      %s110 = sphi 0, %s96
      %s116 = sphi 0, %s118
      %s119 = sphi 0, %s116
      %s120 = sphi 0, %s119
      %s136 = sphi 0, %s120
      %s142 = sphi 0, %s144
      %s145 = sphi 0, %s142
      %s146 = sphi 0, %s145
      %s162 = sphi 0, %s146
      %s170 = sphi 0, %s172
      %s173 = sphi 0, %s170
      %s174 = sphi 0, %s173
      %s190 = sphi 0, %s174
      %s198 = sphi 0, %s200
      %s201 = sphi 0, %s198
      %s202 = sphi 0, %s201
      %s218 = sphi 0, %s202
      %s224 = sphi 0, %s226
      %s227 = sphi 0, %s224
      %s228 = sphi 0, %s227
      %s244 = sphi 0, %s228
      %s250 = sphi 0, %s252
      %s253 = sphi 0, %s250
      %s254 = sphi 0, %s253
      %s270 = sphi 0, %s254
      %s276 = sphi 0, %s278
      %s279 = sphi 0, %s276
      %s280 = sphi 0, %s279
      %s296 = sphi 0, %s280
    $region4: #{tpu_custom_call.1} parent=1 // loop_header_branch
      %24 = sbr.rel (%p22) target = $region8
    $region5: #{tpu_custom_call.1} parent=1 // loop_body
      %s26 = ssub.s32 %s21, 1
      %s27 = ssub.s32 %s21, 2
      %s34 = sadd.s32 1, %s29
      %p35 = scmp.ge.s32.totalorder %s34, 1
      %s36 = scalar_select %p35, 0, %s34
      %s37 = sadd.s32 1, %s28
      %s38 = scalar_select %p35, %s37, %s28
      %p39 = scmp.ge.s32.totalorder %s38, 6
      %s40 = scalar_select %p39, 0, %s38
      %s41 = ssub.s32 %s28, %s40
      %p42 = scmp.eq.s32.totalorder %s41, 0
      %s44 = sadd.s32 %s43, 1
      %s45 = scalar_select %p42, %s43, %s44
      %p48 = pneg %p42
      %p49 = scmp.eq.s32.totalorder %s21, 5
      %p50 = por %p48, %p49
      %p51 = scmp.ne.s32.totalorder %s43, %s46
      %p52 = scmp.eq.s32.totalorder %s21, 0
      %p53 = por %p51, %p52
      %p54 = scmp.ne.s32.totalorder %s43, %s46
      %p55 = scmp.eq.s32.totalorder %s26, 5
      %p56 = por %p54, %p55
      %p57 = scmp.ne.s32.totalorder %s46, %s47
      %p58 = scmp.eq.s32.totalorder %s26, 0
      %p59 = por %p57, %p58
      %p60 = scmp.ne.s32.totalorder %s46, %s47
      %p61 = scmp.eq.s32.totalorder %s27, 5
      %p62 = por %p60, %p61
      %p64 = scmp.ne.s32.totalorder %s47, %s63
      %p65 = scmp.eq.s32.totalorder %s27, 0
      %p66 = por %p64, %p65
      %s67 = ssub.s32 %s28, %s40
      %p68 = scmp.eq.s32.totalorder %s67, 0
      %s70 = sadd.s32 %s69, 1
      %s71 = scalar_select %p68, %s69, %s70
      %p74 = pneg %p68
      %p75 = scmp.eq.s32.totalorder %s21, 5
      %p76 = por %p74, %p75
      %p77 = scmp.ne.s32.totalorder %s69, %s72
      %p78 = scmp.eq.s32.totalorder %s21, 0
      %p79 = por %p77, %p78
      %p80 = scmp.ne.s32.totalorder %s69, %s72
      %p81 = scmp.eq.s32.totalorder %s26, 5
      %p82 = por %p80, %p81
      %p83 = scmp.ne.s32.totalorder %s72, %s73
      %p84 = scmp.eq.s32.totalorder %s26, 0
      %p85 = por %p83, %p84
      %p86 = scmp.ne.s32.totalorder %s72, %s73
      %p87 = scmp.eq.s32.totalorder %s27, 5
      %p88 = por %p86, %p87
      %p90 = scmp.ne.s32.totalorder %s73, %s89
      %p91 = scmp.eq.s32.totalorder %s27, 0
      %p92 = por %p90, %p91
      %s94 = sadd.s32 %s93, 1
      %p97 = scmp.eq.s32.totalorder %s21, 5
      %p98 = scmp.ne.s32.totalorder %s93, %s95
      %p99 = scmp.eq.s32.totalorder %s21, 0
      %p100 = por %p98, %p99
      %p101 = scmp.ne.s32.totalorder %s93, %s95
      %p102 = scmp.eq.s32.totalorder %s26, 5
      %p103 = por %p101, %p102
      %p104 = scmp.ne.s32.totalorder %s95, %s96
      %p105 = scmp.eq.s32.totalorder %s26, 0
      %p106 = por %p104, %p105
      %p107 = scmp.ne.s32.totalorder %s95, %s96
      %p108 = scmp.eq.s32.totalorder %s27, 5
      %p109 = por %p107, %p108
      %p111 = scmp.ne.s32.totalorder %s96, %s110
      %p112 = scmp.eq.s32.totalorder %s27, 0
      %p113 = por %p111, %p112
      %s114 = ssub.s32 %s28, %s40
      %p115 = scmp.eq.s32.totalorder %s114, 0
      %s117 = sadd.s32 %s116, 1
      %s118 = scalar_select %p115, %s116, %s117
      %p121 = pneg %p115
      %p122 = scmp.eq.s32.totalorder %s21, 5
      %p123 = por %p121, %p122
      %p124 = scmp.ne.s32.totalorder %s116, %s119
      %p125 = scmp.eq.s32.totalorder %s21, 0
      %p126 = por %p124, %p125
      %p127 = scmp.ne.s32.totalorder %s116, %s119
      %p128 = scmp.eq.s32.totalorder %s26, 5
      %p129 = por %p127, %p128
      %p130 = scmp.ne.s32.totalorder %s119, %s120
      %p131 = scmp.eq.s32.totalorder %s26, 0
      %p132 = por %p130, %p131
      %p133 = scmp.ne.s32.totalorder %s119, %s120
      %p134 = scmp.eq.s32.totalorder %s27, 5
      %p135 = por %p133, %p134
      %p137 = scmp.ne.s32.totalorder %s120, %s136
      %p138 = scmp.eq.s32.totalorder %s27, 0
      %p139 = por %p137, %p138
      %s140 = ssub.s32 %s28, %s40
      %p141 = scmp.eq.s32.totalorder %s140, 0
      %s143 = sadd.s32 %s142, 1
      %s144 = scalar_select %p141, %s142, %s143
      %p147 = pneg %p141
      %p148 = scmp.eq.s32.totalorder %s21, 5
      %p149 = por %p147, %p148
      %p150 = scmp.ne.s32.totalorder %s142, %s145
      %p151 = scmp.eq.s32.totalorder %s21, 0
      %p152 = por %p150, %p151
      %p153 = scmp.ne.s32.totalorder %s142, %s145
      %p154 = scmp.eq.s32.totalorder %s26, 5
      %p155 = por %p153, %p154
      %p156 = scmp.ne.s32.totalorder %s145, %s146
      %p157 = scmp.eq.s32.totalorder %s26, 0
      %p158 = por %p156, %p157
      %p159 = scmp.ne.s32.totalorder %s145, %s146
      %p160 = scmp.eq.s32.totalorder %s27, 5
      %p161 = por %p159, %p160
      %p163 = scmp.ne.s32.totalorder %s146, %s162
      %p164 = scmp.eq.s32.totalorder %s27, 0
      %p165 = por %p163, %p164
      %s166 = ssub.s32 %s28, %s40
      %s167 = ssub.s32 %s29, %s36
      %s168 = sor.u32 %s166, %s167
      %p169 = scmp.eq.s32.totalorder %s168, 0
      %s171 = sadd.s32 %s170, 1
      %s172 = scalar_select %p169, %s170, %s171
      %p175 = pneg %p169
      %p176 = scmp.eq.s32.totalorder %s21, 5
      %p177 = por %p175, %p176
      %p178 = scmp.ne.s32.totalorder %s170, %s173
      %p179 = scmp.eq.s32.totalorder %s21, 0
      %p180 = por %p178, %p179
      %p181 = scmp.ne.s32.totalorder %s170, %s173
      %p182 = scmp.eq.s32.totalorder %s26, 5
      %p183 = por %p181, %p182
      %p184 = scmp.ne.s32.totalorder %s173, %s174
      %p185 = scmp.eq.s32.totalorder %s26, 0
      %p186 = por %p184, %p185
      %p187 = scmp.ne.s32.totalorder %s173, %s174
      %p188 = scmp.eq.s32.totalorder %s27, 5
      %p189 = por %p187, %p188
      %p191 = scmp.ne.s32.totalorder %s174, %s190
      %p192 = scmp.eq.s32.totalorder %s27, 0
      %p193 = por %p191, %p192
      %s194 = ssub.s32 %s28, %s40
      %s195 = ssub.s32 %s29, %s36
      %s196 = sor.u32 %s194, %s195
      %p197 = scmp.eq.s32.totalorder %s196, 0
      %s199 = sadd.s32 %s198, 1
      %s200 = scalar_select %p197, %s198, %s199
      %p203 = pneg %p197
      %p204 = scmp.eq.s32.totalorder %s21, 5
      %p205 = por %p203, %p204
      %p206 = scmp.ne.s32.totalorder %s198, %s201
      %p207 = scmp.eq.s32.totalorder %s21, 0
      %p208 = por %p206, %p207
      %p209 = scmp.ne.s32.totalorder %s198, %s201
      %p210 = scmp.eq.s32.totalorder %s26, 5
      %p211 = por %p209, %p210
      %p212 = scmp.ne.s32.totalorder %s201, %s202
      %p213 = scmp.eq.s32.totalorder %s26, 0
      %p214 = por %p212, %p213
      %p215 = scmp.ne.s32.totalorder %s201, %s202
      %p216 = scmp.eq.s32.totalorder %s27, 5
      %p217 = por %p215, %p216
      %p219 = scmp.ne.s32.totalorder %s202, %s218
      %p220 = scmp.eq.s32.totalorder %s27, 0
      %p221 = por %p219, %p220
      %s222 = ssub.s32 %s28, %s40
      %p223 = scmp.eq.s32.totalorder %s222, 0
      %s225 = sadd.s32 %s224, 1
      %s226 = scalar_select %p223, %s224, %s225
      %p229 = pneg %p223
      %p230 = scmp.eq.s32.totalorder %s21, 5
      %p231 = por %p229, %p230
      %p232 = scmp.ne.s32.totalorder %s224, %s227
      %p233 = scmp.eq.s32.totalorder %s21, 0
      %p234 = por %p232, %p233
      %p235 = scmp.ne.s32.totalorder %s224, %s227
      %p236 = scmp.eq.s32.totalorder %s26, 5
      %p237 = por %p235, %p236
      %p238 = scmp.ne.s32.totalorder %s227, %s228
      %p239 = scmp.eq.s32.totalorder %s26, 0
      %p240 = por %p238, %p239
      %p241 = scmp.ne.s32.totalorder %s227, %s228
      %p242 = scmp.eq.s32.totalorder %s27, 5
      %p243 = por %p241, %p242
      %p245 = scmp.ne.s32.totalorder %s228, %s244
      %p246 = scmp.eq.s32.totalorder %s27, 0
      %p247 = por %p245, %p246
      %s248 = ssub.s32 %s29, %s36
      %p249 = scmp.eq.s32.totalorder %s248, 0
      %s251 = sadd.s32 %s250, 1
      %s252 = scalar_select %p249, %s250, %s251
      %p255 = pneg %p249
      %p256 = scmp.eq.s32.totalorder %s21, 5
      %p257 = por %p255, %p256
      %p258 = scmp.ne.s32.totalorder %s250, %s253
      %p259 = scmp.eq.s32.totalorder %s21, 0
      %p260 = por %p258, %p259
      %p261 = scmp.ne.s32.totalorder %s250, %s253
      %p262 = scmp.eq.s32.totalorder %s26, 5
      %p263 = por %p261, %p262
      %p264 = scmp.ne.s32.totalorder %s253, %s254
      %p265 = scmp.eq.s32.totalorder %s26, 0
      %p266 = por %p264, %p265
      %p267 = scmp.ne.s32.totalorder %s253, %s254
      %p268 = scmp.eq.s32.totalorder %s27, 5
      %p269 = por %p267, %p268
      %p271 = scmp.ne.s32.totalorder %s254, %s270
      %p272 = scmp.eq.s32.totalorder %s27, 0
      %p273 = por %p271, %p272
      %s274 = ssub.s32 %s28, %s40
      %p275 = scmp.eq.s32.totalorder %s274, 0
      %s277 = sadd.s32 %s276, 1
      %s278 = scalar_select %p275, %s276, %s277
      %p281 = pneg %p275
      %p282 = scmp.eq.s32.totalorder %s21, 5
      %p283 = por %p281, %p282
      %p284 = scmp.ne.s32.totalorder %s276, %s279
      %p285 = scmp.eq.s32.totalorder %s21, 0
      %p286 = por %p284, %p285
      %p287 = scmp.ne.s32.totalorder %s276, %s279
      %p288 = scmp.eq.s32.totalorder %s26, 5
      %p289 = por %p287, %p288
      %p290 = scmp.ne.s32.totalorder %s279, %s280
      %p291 = scmp.eq.s32.totalorder %s26, 0
      %p292 = por %p290, %p291
      %p293 = scmp.ne.s32.totalorder %s279, %s280
      %p294 = scmp.eq.s32.totalorder %s27, 5
      %p295 = por %p293, %p294
      %p297 = scmp.ne.s32.totalorder %s280, %s296
      %p298 = scmp.eq.s32.totalorder %s27, 0
      %p299 = por %p297, %p298
      %p300 = scmp.le.s32.totalorder 1, %s21
      %p301 = scmp.lt.s32.totalorder %s21, 7
      %p302 = pnand %p300, %p301
      %p303 = pneg %p302
      // Predicated region
      $region9: #{tpu_custom_call.1} parent=5 // pred_check
        _
      $region10: #{tpu_custom_call.1} parent=5 // pred_check_branch
        %305 = sbr.rel (%p302) target = $region12
      $region11: #{tpu_custom_call.1} parent=5 // pred_region
        %s306 = ssub.s32 %s21, 1
        // Predicated region
        $region13: #{tpu_custom_call.1} parent=11 // pred_check
          %p307 = pneg %p106
        $region14: #{tpu_custom_call.1} parent=11 // pred_check_branch
          %309 = sbr.rel (%p307) target = $region16
        $region15: #{tpu_custom_call.1} parent=11 // pred_region
          _
        $region16: #{tpu_custom_call.1} parent=11 // pred_fallthru
          _
        // Predicated region
        $region17: #{tpu_custom_call.1} parent=11 // pred_check
          %p310 = pneg %p266
        $region18: #{tpu_custom_call.1} parent=11 // pred_check_branch
          %312 = sbr.rel (%p310) target = $region20
        $region19: #{tpu_custom_call.1} parent=11 // pred_region
          %s313 = smul.u32 2, %s31
          %p314 = scmp.lt.s32.totalorder %s313, 1
          %s315 = scalar_select %p314, %s313, 1
          %s316 = scalar_lea.vmem %s8, %s315
          %s317 = smul.u32 2, %s31
        $region20: #{tpu_custom_call.1} parent=11 // pred_fallthru
          _
      $region12: #{tpu_custom_call.1} parent=5 // pred_fallthru
        _
      %p318 = scmp.lt.s32.totalorder %s21, 6
      // Predicated region
      $region21: #{tpu_custom_call.1} parent=5 // pred_check
        %p319 = pneg %p318
      $region22: #{tpu_custom_call.1} parent=5 // pred_check_branch
        %321 = sbr.rel (%p319) target = $region24
      $region23: #{tpu_custom_call.1} parent=5 // pred_region
        // Predicated region
        $region25: #{tpu_custom_call.1} parent=23 // pred_check
          %p322 = pneg %p53
        $region26: #{tpu_custom_call.1} parent=23 // pred_check_branch
          %324 = sbr.rel (%p322) target = $region28
        $region27: #{tpu_custom_call.1} parent=23 // pred_region
          %p325 = scmp.lt.s32.totalorder %s28, 5
          %s326 = scalar_select %p325, %s28, 5
          %s327 = smul.addr %s326, 8
          %s328 = scalar_lea.vmem %s0, %s327
        $region28: #{tpu_custom_call.1} parent=23 // pred_fallthru
          _
        // Predicated region
        $region29: #{tpu_custom_call.1} parent=23 // pred_check
          %p329 = pneg %p79
        $region30: #{tpu_custom_call.1} parent=23 // pred_check_branch
          %331 = sbr.rel (%p329) target = $region32
        $region31: #{tpu_custom_call.1} parent=23 // pred_region
          %p332 = scmp.lt.s32.totalorder %s28, 5
          %s333 = scalar_select %p332, %s28, 5
          %s334 = smul.addr %s333, 8
          %s335 = scalar_lea.vmem %s1, %s334
        $region32: #{tpu_custom_call.1} parent=23 // pred_fallthru
          _
        // Predicated region
        $region33: #{tpu_custom_call.1} parent=23 // pred_check
          %p336 = pneg %p126
        $region34: #{tpu_custom_call.1} parent=23 // pred_check_branch
          %338 = sbr.rel (%p336) target = $region36
        $region35: #{tpu_custom_call.1} parent=23 // pred_region
          %p339 = scmp.lt.s32.totalorder %s28, 5
          %s340 = scalar_select %p339, %s28, 5
          %s341 = scalar_lea.vmem %s3, %s340
        $region36: #{tpu_custom_call.1} parent=23 // pred_fallthru
          _
        // Predicated region
        $region37: #{tpu_custom_call.1} parent=23 // pred_check
          %p342 = pneg %p152
        $region38: #{tpu_custom_call.1} parent=23 // pred_check_branch
          %344 = sbr.rel (%p342) target = $region40
        $region39: #{tpu_custom_call.1} parent=23 // pred_region
          %p345 = scmp.lt.s32.totalorder %s28, 5
          %s346 = scalar_select %p345, %s28, 5
          %s347 = scalar_lea.vmem %s4, %s346
        $region40: #{tpu_custom_call.1} parent=23 // pred_fallthru
          _
        // Predicated region
        $region41: #{tpu_custom_call.1} parent=23 // pred_check
          %p348 = pneg %p180
        $region42: #{tpu_custom_call.1} parent=23 // pred_check_branch
          %350 = sbr.rel (%p348) target = $region44
        $region43: #{tpu_custom_call.1} parent=23 // pred_region
          %s351 = smul.u32 2, %s29
          %p352 = scmp.lt.s32.totalorder %s28, 5
          %s353 = scalar_select %p352, %s28, 5
          %p354 = scmp.lt.s32.totalorder %s351, 1
          %s355 = scalar_select %p354, %s351, 1
          %s356 = smul.addr %s353, 2
          %s357 = sadd.s32 %s355, %s356
          %s358 = smul.addr %s357, 8
          %s359 = scalar_lea.vmem %s5, %s358
          %s360 = smul.u32 2, %s29
        $region44: #{tpu_custom_call.1} parent=23 // pred_fallthru
          _
        // Predicated region
        $region45: #{tpu_custom_call.1} parent=23 // pred_check
          %p361 = pneg %p208
        $region46: #{tpu_custom_call.1} parent=23 // pred_check_branch
          %363 = sbr.rel (%p361) target = $region48
        $region47: #{tpu_custom_call.1} parent=23 // pred_region
          %s364 = sand.u32 %s198, 1
          %s365 = scalar_lea.sflag [#allocation7], %s364
          %s366 = sand.u32 %s198, 1
          %s367 = smul.addr %s366, 16
          %s368 = scalar_lea.vmem [#allocation6], %s367
          %s369 = smul.u32 2, %s29
          %371 = vsyncadd %s365, 0
          %s372 = smul.addr %s28, 2
          %s373 = sadd.s32 %s369, %s372
          %s374 = smul.addr %s373, 8
          %s375 = scalar_lea.hbm %s6, %s374
          %s377 = sshll.u32 %s375, 4
          %s378 = int_to_ptr.hbm [resolvable:$true] %s377
          %s379 = sshll.u32 %s368, 4
          %s380 = int_to_ptr.vmem [resolvable:$true] %s379
          %382 = dma.hbm_to_vmem [thread:$0]  %s378, 256, %s380, %s365
        $region48: #{tpu_custom_call.1} parent=23 // pred_fallthru
          _
        // Predicated region
        $region49: #{tpu_custom_call.1} parent=23 // pred_check
          %p383 = pneg %p234
        $region50: #{tpu_custom_call.1} parent=23 // pred_check_branch
          %385 = sbr.rel (%p383) target = $region52
        $region51: #{tpu_custom_call.1} parent=23 // pred_region
          %p386 = scmp.lt.s32.totalorder %s28, 5
          %s387 = scalar_select %p386, %s28, 5
          %s388 = smul.addr %s387, 8
          %s389 = scalar_lea.vmem %s7, %s388
        $region52: #{tpu_custom_call.1} parent=23 // pred_fallthru
          _
      $region24: #{tpu_custom_call.1} parent=5 // pred_fallthru
        _
      %p390 = scmp.le.s32.totalorder 1, %s21
      %p391 = scmp.lt.s32.totalorder %s21, 7
      %p392 = pnand %p390, %p391
      %p393 = pneg %p392
      // Predicated region
      $region53: #{tpu_custom_call.1} parent=5 // pred_check
        _
      $region54: #{tpu_custom_call.1} parent=5 // pred_check_branch
        %395 = sbr.rel (%p392) target = $region56
      $region55: #{tpu_custom_call.1} parent=5 // pred_region
        %s396 = ssub.s32 %s21, 1
        %s397 = sand.u32 %s201, 1
        %s398 = scalar_lea.sflag [#allocation7], %s397
        %s399 = sand.u32 %s201, 1
        %s400 = smul.addr %s399, 16
        %s401 = scalar_lea.vmem [#allocation6], %s400
        // Predicated region
        $region57: #{tpu_custom_call.1} parent=55 // pred_check
          %p402 = pneg %p214
        $region58: #{tpu_custom_call.1} parent=55 // pred_check_branch
          %404 = sbr.rel (%p402) target = $region60
        $region59: #{tpu_custom_call.1} parent=55 // pred_region
          %406 = dma.done %s398, 256
        $region60: #{tpu_custom_call.1} parent=55 // pred_fallthru
          _
        %p407 = scmp.lt.s32.totalorder %s30, 5
        %s408 = scalar_select %p407, %s30, 5
        %s409 = smul.addr %s408, 8
        %s410 = scalar_lea.vmem %s0, %s409
        %p411 = pneg %p59
        %p412 = pneg %p56
        %p413 = scmp.lt.s32.totalorder %s30, 5
        %s414 = scalar_select %p413, %s30, 5
        %s415 = smul.addr %s414, 8
        %s416 = scalar_lea.vmem %s1, %s415
        %p417 = pneg %p85
        %p418 = pneg %p82
        %p419 = pneg %p106
        %p420 = pneg %p103
        %p421 = scmp.lt.s32.totalorder %s30, 5
        %s422 = scalar_select %p421, %s30, 5
        %s423 = scalar_lea.vmem %s3, %s422
        %p424 = pneg %p132
        %p425 = pneg %p129
        %p426 = scmp.lt.s32.totalorder %s30, 5
        %s427 = scalar_select %p426, %s30, 5
        %s428 = scalar_lea.vmem %s4, %s427
        %p429 = pneg %p158
        %p430 = pneg %p155
        %s431 = smul.u32 2, %s31
        %p432 = scmp.lt.s32.totalorder %s30, 5
        %s433 = scalar_select %p432, %s30, 5
        %p434 = scmp.lt.s32.totalorder %s431, 1
        %s435 = scalar_select %p434, %s431, 1
        %s436 = smul.addr %s433, 2
        %s437 = sadd.s32 %s435, %s436
        %s438 = smul.addr %s437, 8
        %s439 = scalar_lea.vmem %s5, %s438
        %p440 = pneg %p186
        %p441 = pneg %p183
        %s442 = sand.u32 %s201, 1
        %s443 = scalar_lea.sflag [#allocation7], %s442
        %s444 = sand.u32 %s201, 1
        %s445 = smul.addr %s444, 16
        %s446 = scalar_lea.vmem [#allocation6], %s445
        %p447 = pneg %p214
        %p448 = pneg %p211
        %p449 = scmp.lt.s32.totalorder %s30, 5
        %s450 = scalar_select %p449, %s30, 5
        %s451 = smul.addr %s450, 8
        %s452 = scalar_lea.vmem %s7, %s451
        %p453 = pneg %p240
        %p454 = pneg %p237
        %s455 = smul.u32 2, %s31
        %p456 = scmp.lt.s32.totalorder %s455, 1
        %s457 = scalar_select %p456, %s455, 1
        %s458 = scalar_lea.vmem %s8, %s457
        %p459 = pneg %p266
        %p460 = pneg %p263
        %p461 = pneg %p292
        %p462 = pneg %p289
        %s463 = sand.u32 %s279, 1
        %s464 = scalar_lea.sflag [#allocation8], %s463
        %s465 = sand.u32 %s279, 1
        %s466 = scalar_lea.vmem [#allocation9], %s465
        %p467 = scmp.lt.s32.totalorder %s30, 5
        %s468 = scalar_select %p467, %s30, 5
        %s469 = smul.addr %s468, 8
        %s470 = scalar_lea.vmem %s0, %s469
        %p471 = scmp.lt.s32.totalorder %s30, 5
        %s472 = scalar_select %p471, %s30, 5
        %s473 = smul.addr %s472, 8
        %s474 = scalar_lea.vmem %s1, %s473
        %p475 = scmp.lt.s32.totalorder %s30, 5
        %s476 = scalar_select %p475, %s30, 5
        %s477 = scalar_lea.vmem %s3, %s476
        %p478 = scmp.lt.s32.totalorder %s30, 5
        %s479 = scalar_select %p478, %s30, 5
        %s480 = scalar_lea.vmem %s4, %s479
        %s481 = smul.u32 2, %s31
        %p482 = scmp.lt.s32.totalorder %s30, 5
        %s483 = scalar_select %p482, %s30, 5
        %p484 = scmp.lt.s32.totalorder %s481, 1
        %s485 = scalar_select %p484, %s481, 1
        %s486 = smul.addr %s483, 2
        %s487 = sadd.s32 %s485, %s486
        %s488 = smul.addr %s487, 8
        %s489 = scalar_lea.vmem %s5, %s488
        %s490 = smul.u32 2, %s31
        %s491 = smul.u32 2, %s31
        %p492 = scmp.lt.s32.totalorder %s30, 5
        %s493 = scalar_select %p492, %s30, 5
        %s494 = smul.addr %s493, 8
        %s495 = scalar_lea.vmem %s7, %s494
        %s496 = smul.u32 2, %s31
        %p497 = scmp.lt.s32.totalorder %s496, 1
        %s498 = scalar_select %p497, %s496, 1
        %s499 = scalar_lea.vmem %s8, %s498
        %s500 = smul.u32 2, %s31
        %v501 = vlaneseq
        %v502 = vand.u32 %v501, 127
        %p503 = scmp.eq.s32.totalorder %s31, 0
        // Predicated region
        $region61: #{tpu_custom_call.1} parent=55 // pred_check
          %p504 = pneg %p503
        $region62: #{tpu_custom_call.1} parent=55 // pred_check_branch
          %506 = sbr.rel (%p504) target = $region64
        $region63: #{tpu_custom_call.1} parent=55 // pred_region
          %vm507 = vcmask 7168
          %508 = vst.msk [vmem:[#allocation2] sm:$0xff] %vm507, 0.0
          %509 = vst.msk [vmem:[#allocation3] sm:$0xff] %vm507, 0.0
          %510 = vst.msk [vmem:[#allocation4] sm:$0xff] %vm507, 0.0
          %511 = vst.msk [vmem:[#allocation5] sm:$0xff] %vm507, 0.0
          %v512 = vld [vmem:[%s470] sm:$0xff]
          %v513 = vld [vmem:[%s474] sm:$0xff]
          %v514 = vld [vmem:[%s2] sm:$0x1]
          %515 = vset.pattern.permute.xlu0 0
          %516 = vperm.xlu0 %515, %v513
          %v517 = vpop.permute.xlu0 %516
          %vm518 = vcmp.eq.s32.totalorder %v502, %v517
          %v519 = vsel %vm518, 1, 0
          %v520 = vcvt.s32.f32 %v519
          %v522 = vperm.slane %v514, 0
          %v524 = vmul.f32 %v520, %v522
          %vm525 = vcmask 31744
          %v526 = vsel %vm525, %v524, 0.0
          %527 = vadd.xlane.f32.xlu0 %v526
          %v528 = vpop.xlane.xlu0 %527
          %v529 = vsel %vm525, %v512, -inf
          %530 = vmax.xlane.f32.xlu0 %v529
          %v531 = vpop.xlane.xlu0 %530
          %v532 = vsub.f32 %v512, %v531
          %v533 = vmul.f32 %v532, 1.442695
          %v534 = vpow.pop %v533
          %v535 = vsel %vm525, %v534, 0.0
          %536 = vadd.xlane.f32.xlu0 %v535
          %v537 = vpop.xlane.xlu0 %536
          %v538 = vlog2.pop %v537
          %v539 = vmul.f32 %v538, 0.6931472
          %v540 = vadd.f32 %v531, %v539
          %v541 = vmul.f32 %v520, %v512
          %v542 = vsel %vm525, %v541, 0.0
          %543 = vadd.xlane.f32.xlu0 %v542
          %v544 = vpop.xlane.xlu0 %543
          %v545 = vsub.f32 %v540, %v544
          %v546 = vmul.f32 %v545, %v528
          %v547 = vsel %vm507, %v546, 0.0
          %548 = vadd.xlane.f32.xlu0 %v547
          %v549 = vpop.xlane.xlu0 %548
          %v550 = vrot.slane %v549, 4
          %v551 = vadd.f32 %v549, %v550
          %v552 = vrot.slane %v551, 2
          %v553 = vadd.f32 %v551, %v552
          %v554 = vrot.slane %v553, 1
          %v555 = vadd.f32 %v553, %v554
          %s556 = vtos %v555
          %v557 = vsel %vm507, %v528, 0.0
          %558 = vadd.xlane.f32.xlu0 %v557
          %v559 = vpop.xlane.xlu0 %558
          %v560 = vrot.slane %v559, 4
          %v561 = vadd.f32 %v559, %v560
          %v562 = vrot.slane %v561, 2
          %v563 = vadd.f32 %v561, %v562
          %v564 = vrot.slane %v563, 1
          %v565 = vadd.f32 %v563, %v564
          %s566 = vtos %v565
          %v567 = vld [vmem:[%s477] sm:$0x1]
          %v568 = vld [vmem:[%s480] sm:$0x1]
          %v569 = vand.u32 2147483647, %v567
          %v570 = vsub.f32 0.0, %v569
          %v571 = vmul.f32 %v570, 1.442695
          %v572 = vpow.pop %v571
          %v573 = vadd.f32 %v572, 1.0
          %v574 = vrcp.pop %v573
          %vm575 = vcmp.ge.f32.partialorder %v567, 0.0
          %v576 = vmul.f32 %v572, %v574
          %v577 = vsel %vm575, %v574, %v576
          %v578 = vmax.f32 %v567, 0.0
          %v579 = vmul.f32 %v567, %v568
          %v580 = vsub.f32 %v578, %v579
          %v581 = vlog2.pop %v573
          %v582 = vmul.f32 %v581, 0.6931472
          %v583 = vadd.f32 %v580, %v582
          %v584 = vsub.f32 1.0, %v568
          %v585 = vmul.f32 %v577, %v584
          %v586 = vsub.f32 1.0, %v577
          %v587 = vmul.f32 %v586, %v568
          %v588 = vadd.f32 %v585, %v587
          %v589 = vmul.f32 %v568, 0.25
          %v590 = vmul.f32 %v584, 0.75
          %v591 = vadd.f32 %v589, %v590
          %v592 = vmul.f32 %v591, %v583
          %v593 = vmul.f32 %v592, %v588
          %v594 = vmul.f32 %v593, %v588
          %vm595 = vcmask 57344
          %v596 = vsel %vm595, %v594, 0.0
          %597 = vadd.xlane.f32.xlu0 %v596
          %v598 = vpop.xlane.xlu0 %597
          %v599 = vrot.slane %v598, 4
          %v600 = vadd.f32 %v598, %v599
          %v601 = vrot.slane %v600, 2
          %v602 = vadd.f32 %v600, %v601
          %v603 = vrot.slane %v602, 1
          %v604 = vadd.f32 %v602, %v603
          %s605 = vtos %v604
          %v606 = vrcp.pop 8.0
          %v607 = vmul.f32 8.0, %v606
          %v608 = vsub.f32 1.0, %v607
          %v609 = vmul.f32 %v606, %v608
          %v610 = vadd.f32 %v606, %v609
          %vm611 = vweird.f32 %v606
          %v612 = vsel %vm611, %v606, %v610
          %s613 = vtos %v612
          %s614 = smul.f32 %s605, %s613
          %vm615 = vcmp.eq.s32.totalorder %v502, 0
          %v616 = vstv %s556
          %v617 = vsel %vm615, %v616, 0.0
          %vm618 = vcmp.eq.s32.totalorder %v502, 1
          %v619 = vstv %s566
          %v620 = vsel %vm618, %v619, 0.0
          %v621 = vadd.f32 %v617, %v620
          %vm622 = vcmp.eq.s32.totalorder %v502, 4
          %v623 = vstv %s614
          %v624 = vsel %vm622, %v623, 0.0
          %v625 = vadd.f32 %v621, %v624
          %626 = vst [vmem:[%s466] sm:$0x1] %v625
        $region64: #{tpu_custom_call.1} parent=55 // pred_fallthru
          _
        %v627 = vld [vmem:[%s489] sm:$0xff]
        %v628 = vld [vmem:[%s489 + $0x8] sm:$0xff]
        %v629 = vld [vmem:[%s401] sm:$0xff]
        %v630 = vld [vmem:[%s401 + $0x8] sm:$0xff]
        %v631 = vld [vmem:[%s499] sm:$0x3]
        %v632 = vand.u32 2147483647, %v627
        %v633 = vand.u32 2147483647, %v628
        %v634 = vsub.f32 0.0, %v632
        %v635 = vsub.f32 0.0, %v633
        %v636 = vmul.f32 %v634, 1.442695
        %v637 = vpow.pop %v636
        %v638 = vmul.f32 %v635, 1.442695
        %v639 = vpow.pop %v638
        %v640 = vadd.f32 %v637, 1.0
        %v641 = vadd.f32 %v639, 1.0
        %v642 = vrcp.pop %v640
        %v643 = vrcp.pop %v641
        %vm644 = vcmp.ge.f32.partialorder %v627, 0.0
        %vm645 = vcmp.ge.f32.partialorder %v628, 0.0
        %v646 = vmul.f32 %v637, %v642
        %v647 = vmul.f32 %v639, %v643
        %v648 = vsel %vm644, %v642, %v646
        %v649 = vsel %vm645, %v643, %v647
        %v651 = vperm.slane %v631, 0
        %v652 = vperm.slane %v631, 1
        %v655 = vmul.f32 %v648, %v651
        %v656 = vmul.f32 %v649, %v652
        %v657 = vmax.f32 %v627, 0.0
        %v658 = vmax.f32 %v628, 0.0
        %v659 = vmul.f32 %v627, %v629
        %v660 = vmul.f32 %v628, %v630
        %v661 = vsub.f32 %v657, %v659
        %v662 = vsub.f32 %v658, %v660
        %v663 = vlog2.pop %v640
        %v664 = vmul.f32 %v663, 0.6931472
        %v665 = vlog2.pop %v641
        %v666 = vmul.f32 %v665, 0.6931472
        %v667 = vadd.f32 %v661, %v664
        %v668 = vadd.f32 %v662, %v666
        %v669 = vmul.f32 %v667, %v651
        %v670 = vmul.f32 %v668, %v652
        %v671 = vld [vmem:[#allocation2] sm:$0xff]
        %v672 = vadd.f32 %v669, %v670
        %673 = vadd.xlane.f32.xlu0 %v672
        %v674 = vpop.xlane.xlu0 %673
        %v675 = vadd.f32 %v671, %v674
        %vm676 = vcmask 7168
        %677 = vst.msk [vmem:[#allocation2] sm:$0xff] %vm676, %v675
        %v678 = vld [vmem:[#allocation3] sm:$0xff]
        %v679 = vmul.f32 %v655, %v629
        %v680 = vmul.f32 %v656, %v630
        %v681 = vadd.f32 %v679, %v680
        %682 = vadd.xlane.f32.xlu0 %v681
        %v683 = vpop.xlane.xlu0 %682
        %v684 = vadd.f32 %v678, %v683
        %685 = vst.msk [vmem:[#allocation3] sm:$0xff] %vm676, %v684
        %v686 = vld [vmem:[#allocation4] sm:$0xff]
        %v687 = vadd.f32 %v655, %v656
        %688 = vadd.xlane.f32.xlu0 %v687
        %v689 = vpop.xlane.xlu0 %688
        %v690 = vadd.f32 %v686, %v689
        %691 = vst.msk [vmem:[#allocation4] sm:$0xff] %vm676, %v690
        %v692 = vld [vmem:[#allocation5] sm:$0xff]
        %v693 = vmul.f32 %v629, %v651
        %v694 = vmul.f32 %v630, %v652
        %v695 = vadd.f32 %v693, %v694
        %696 = vadd.xlane.f32.xlu0 %v695
        %v697 = vpop.xlane.xlu0 %696
        %v698 = vadd.f32 %v692, %v697
        %699 = vst.msk [vmem:[#allocation5] sm:$0xff] %vm676, %v698
        // Predicated region
        $region65: #{tpu_custom_call.1} parent=55 // pred_check
          %p700 = pneg %p503
        $region66: #{tpu_custom_call.1} parent=55 // pred_check_branch
          %702 = sbr.rel (%p700) target = $region68
        $region67: #{tpu_custom_call.1} parent=55 // pred_region
          %v703 = vld [vmem:[%s495] sm:$0xff]
          %v704 = vld [vmem:[#allocation2] sm:$0xff]
          %v705 = vmul.f32 %v704, 0.00390625
          %v706 = vld [vmem:[#allocation3] sm:$0xff]
          %v707 = vmul.f32 %v706, 2.0
          %v708 = vadd.f32 %v707, 1.0
          %v709 = vld [vmem:[#allocation4] sm:$0xff]
          %v710 = vld [vmem:[#allocation5] sm:$0xff]
          %v711 = vadd.f32 %v709, %v710
          %v712 = vadd.f32 %v711, 1.0
          %v713 = vrcp.pop %v712
          %v714 = vmul.f32 %v712, %v713
          %v715 = vsub.f32 1.0, %v714
          %v716 = vmul.f32 %v713, %v715
          %v717 = vadd.f32 %v713, %v716
          %vm718 = vweird.f32 %v712
          %vm719 = vweird.f32 %v713
          %vm720 = vmor %vm718, %vm719
          %v721 = vsel %vm720, %v713, %v717
          %v722 = vand.u32 2147483647, %v712
          %vm723 = vcmp.eq.f32.partialorder %v722, 8.507059e+37
          %v724 = vand.u32 %v712, 2147483648
          %v725 = vor.u32 1.1754944e-38, %v724
          %v726 = vsel %vm723, %v725, %v721
          %v727 = vmul.f32 %v708, %v726
          %v728 = vsub.f32 1.0, %v727
          %v729 = vmul.f32 %v705, %v703
          %v730 = vsel %vm676, %v729, 0.0
          %731 = vadd.xlane.f32.xlu0 %v730
          %v732 = vpop.xlane.xlu0 %731
          %v733 = vrot.slane %v732, 4
          %v734 = vadd.f32 %v732, %v733
          %v735 = vrot.slane %v734, 2
          %v736 = vadd.f32 %v734, %v735
          %v737 = vrot.slane %v736, 1
          %v738 = vadd.f32 %v736, %v737
          %s739 = vtos %v738
          %v740 = vmul.f32 %v728, %v703
          %v741 = vsel %vm676, %v740, 0.0
          %742 = vadd.xlane.f32.xlu0 %v741
          %v743 = vpop.xlane.xlu0 %742
          %v744 = vrot.slane %v743, 4
          %v745 = vadd.f32 %v743, %v744
          %v746 = vrot.slane %v745, 2
          %v747 = vadd.f32 %v745, %v746
          %v748 = vrot.slane %v747, 1
          %v749 = vadd.f32 %v747, %v748
          %s750 = vtos %v749
          %v751 = vld [vmem:[%s466] sm:$0x1]
          %vm752 = vcmp.eq.s32.totalorder %v502, 2
          %v753 = vstv %s739
          %v754 = vsel %vm752, %v753, 0.0
          %vm755 = vcmp.eq.s32.totalorder %v502, 3
          %v756 = vstv %s750
          %v757 = vsel %vm755, %v756, 0.0
          %v758 = vadd.f32 %v754, %v757
          %v759 = vadd.f32 %v751, %v758
          %760 = vst [vmem:[%s466] sm:$0x1] %v759
        $region68: #{tpu_custom_call.1} parent=55 // pred_fallthru
          _
        %s761 = sand.u32 %s279, 1
        %s762 = scalar_lea.sflag [#allocation8], %s761
        %s763 = sand.u32 %s279, 1
        %s764 = scalar_lea.vmem [#allocation9], %s763
        // Predicated region
        $region69: #{tpu_custom_call.1} parent=55 // pred_check
          %p765 = pneg %p289
        $region70: #{tpu_custom_call.1} parent=55 // pred_check_branch
          %767 = sbr.rel (%p765) target = $region72
        $region71: #{tpu_custom_call.1} parent=55 // pred_region
          %769 = vsyncadd %s762, 0
          %s770 = scalar_lea.hbm %s9, %s30
          %s772 = sshll.u32 %s764, 4
          %s773 = int_to_ptr.vmem [resolvable:$true] %s772
          %s774 = sshll.u32 %s770, 4
          %s775 = int_to_ptr.hbm [resolvable:$true] %s774
          %777 = dma.vmem_to_hbm [thread:$0]  %s773, 16, %s775, %s762
        $region72: #{tpu_custom_call.1} parent=55 // pred_fallthru
          _
      $region56: #{tpu_custom_call.1} parent=5 // pred_fallthru
        _
      %p778 = scmp.le.s32.totalorder 2, %s21
      // Predicated region
      $region73: #{tpu_custom_call.1} parent=5 // pred_check
        %p779 = pneg %p778
      $region74: #{tpu_custom_call.1} parent=5 // pred_check_branch
        %781 = sbr.rel (%p779) target = $region76
      $region75: #{tpu_custom_call.1} parent=5 // pred_region
        %s782 = ssub.s32 %s21, 2
        // Predicated region
        $region77: #{tpu_custom_call.1} parent=75 // pred_check
          %p783 = pneg %p295
        $region78: #{tpu_custom_call.1} parent=75 // pred_check_branch
          %785 = sbr.rel (%p783) target = $region80
        $region79: #{tpu_custom_call.1} parent=75 // pred_region
          %s786 = sand.u32 %s280, 1
          %s787 = scalar_lea.sflag [#allocation8], %s786
          %s788 = sand.u32 %s280, 1
          %s789 = scalar_lea.vmem [#allocation9], %s788
          %791 = dma.done %s787, 16
        $region80: #{tpu_custom_call.1} parent=75 // pred_fallthru
          _
      $region76: #{tpu_custom_call.1} parent=5 // pred_fallthru
        _
    $region6: #{tpu_custom_call.1} parent=1 // loop_footer
      %s25 = sadd.s32 1, %s21
    $region7: #{tpu_custom_call.1} parent=1 // loop_footer_branch
      %20 = sbr.rel target = $region3
    $region8: #{tpu_custom_call.1} parent=1 // loop_exit
      _
    %792 = vsyncpa [#allocation7], 1
    %s793 = scalar_lea.sflag [#allocation7], 1
    %794 = vsyncpa %s793, 1
    %795 = vsyncpa [#allocation8], 1
    %s796 = scalar_lea.sflag [#allocation8], 1
    %797 = vsyncpa %s796, 1

</llo_original>
